<compile_context>
chip_gen: v6e
topology: v6e:2x2x1
jax: 0.10.0
libtpu: 0.0.40
codegen_flags: <defaults>
</compile_context>

<pallas_src>
import functools

import jax
import jax.numpy as jnp
from jax.experimental import pallas as pl
from jax.experimental.pallas import tpu as pltpu

_EPS = 1e-6  # F.pairwise_distance default eps


def _triplet_kernel(params_ref, a_ref, p_ref, n_ref, out_ref, acc_ref, *,
                    n_valid, tile_rows, num_tiles):
    i = pl.program_id(0)

    @pl.when(i == 0)
    def _zero():
        acc_ref[...] = jnp.zeros_like(acc_ref)

    # Hyper-parameters from scalar-prefetch SMEM (no recompile per value).
    t1 = params_ref[0]
    t2 = params_ref[1]
    beta = params_ref[2]

    a = a_ref[...]
    # Diff (+eps) in the input dtype (matches PyTorch run in that dtype, e.g.
    # bf16); promote to f32 only for the squared-sum accumulation.
    eps = jnp.asarray(_EPS, dtype=a.dtype)
    dp = (a - p_ref[...] + eps).astype(jnp.float32)
    dn = (a - n_ref[...] + eps).astype(jnp.float32)

    matched = jnp.sum(dp * dp, axis=-1, keepdims=True)        # (tile_rows, 1)
    mismatched = jnp.sum(dn * dn, axis=-1, keepdims=True)     # (tile_rows, 1)

    part_1 = jnp.maximum(matched - mismatched, t1)
    part_2 = jnp.maximum(matched, t2)
    hinge = part_1 + beta * part_2                             # (tile_rows, 1)

    rem = n_valid % tile_rows
    if rem == 0:
        # Batch is tile-aligned: every tile is fully valid, no masking at all.
        acc_ref[...] += jnp.sum(hinge, axis=0, keepdims=True)
    else:
        is_boundary = i == (num_tiles - 1)

        @pl.when(jnp.logical_not(is_boundary))
        def _full_tile():
            acc_ref[...] += jnp.sum(hinge, axis=0, keepdims=True)

        @pl.when(is_boundary)
        def _partial_tile():
            # Rows past the true batch size come from Pallas's implicit
            # last-block padding (undefined contents) -> select them to zero
            # before the cross-row reduction.
            row = jax.lax.broadcasted_iota(jnp.int32, (tile_rows, 1), 0)
            valid = (i * tile_rows + row) < n_valid
            masked = jnp.where(valid, hinge, jnp.float32(0.0))
            acc_ref[...] += jnp.sum(masked, axis=0, keepdims=True)

    @pl.when(i == num_tiles - 1)
    def _finalize():
        out_ref[...] = acc_ref[...]        # single (1,1) HBM write


def _vmem_capacity_bytes():
    try:
        return int(getattr(pltpu.get_tpu_info(), "vmem_capacity_bytes", 64 << 20))
    except Exception:
        return 64 << 20                    # conservative (v7x-sized)


def _choose_tile_rows(n_rows, d, itemsize, vmem_capacity, max_tile_rows=None):
    """Largest batch tile such that (3 inputs x 2 pipeline buffers + f32
    temporaries) fit comfortably in this chip's VMEM, using the *padded*
    lane/sublane footprint."""
    row_align = max(8, 32 // max(itemsize, 1))   # f32 -> 8, bf16 -> 16, int8 -> 32
    d_pad = -(-d // 128) * 128                   # lanes round up to 128
    per_row = 3 * 2 * d_pad * itemsize           # double-buffered inputs
    per_row += 4 * d_pad * 4                     # f32 temporaries (dp, dn, slack)
    budget = int(vmem_capacity * 0.7)
    tn = (budget // per_row) // row_align * row_align
    tn = max(row_align, min(tn, 8192))
    if max_tile_rows is not None:
        tn = min(tn, max(row_align, (max_tile_rows // row_align) * row_align))
    n_aligned = -(-n_rows // row_align) * row_align
    return int(min(tn, n_aligned))


def triplet_loss(anchor, positive, negative, t1, t2, beta, *, max_tile_rows=None):
    n, d = anchor.shape
    itemsize = jnp.dtype(anchor.dtype).itemsize
    vmem_capacity = _vmem_capacity_bytes()
    tile_rows = _choose_tile_rows(n, d, itemsize, vmem_capacity, max_tile_rows)
    num_tiles = pl.cdiv(n, tile_rows)

    params = jnp.stack([
        jnp.asarray(t1, jnp.float32),
        jnp.asarray(t2, jnp.float32),
        jnp.asarray(beta, jnp.float32),
    ])

    # VMEM limit from the padded footprint (lanes rounded to 128), with headroom.
    d_pad = -(-d // 128) * 128
    in_buf_bytes = 3 * 2 * tile_rows * d_pad * itemsize
    temp_bytes = 4 * tile_rows * d_pad * 4
    vmem_need = in_buf_bytes + temp_bytes + (4 << 20)
    vmem_limit = int(max(16 << 20, min(vmem_need, vmem_capacity - (4 << 20))))

    kernel = functools.partial(
        _triplet_kernel, n_valid=n, tile_rows=tile_rows, num_tiles=num_tiles)

    in_spec = pl.BlockSpec((tile_rows, d), lambda i, params_ref: (i, 0))

    partial_sum = pl.pallas_call(
        kernel,
        out_shape=jax.ShapeDtypeStruct((1, 1), jnp.float32),
        grid_spec=pltpu.PrefetchScalarGridSpec(
            num_scalar_prefetch=1,
            grid=(num_tiles,),
            in_specs=[in_spec, in_spec, in_spec],
            out_specs=pl.BlockSpec((1, 1), lambda i, params_ref: (0, 0)),
            scratch_shapes=[pltpu.VMEM((1, 1), jnp.float32)],
        ),
        compiler_params=pltpu.CompilerParams(
            dimension_semantics=("arbitrary",),
            vmem_limit_bytes=vmem_limit,
        ),
        cost_estimate=pl.CostEstimate(
            flops=8 * n * d,
            transcendentals=0,
            bytes_accessed=3 * n * d * itemsize + 4,
        ),
    )(params, anchor, positive, negative)

    return partial_sum[0, 0] / jnp.float32(n)


def _reference(anchor, positive, negative, t1, t2, beta):
    # Pure-JAX reference matching the PyTorch module.
    matched = jnp.sum((anchor - positive + _EPS) ** 2, axis=1)
    mismatched = jnp.sum((anchor - negative + _EPS) ** 2, axis=1)
    part_1 = jnp.maximum(matched - mismatched, t1)
    part_2 = jnp.maximum(matched, t2)
    return jnp.mean(part_1 + beta * part_2)


if __name__ == "__main__":
    key = jax.random.PRNGKey(0)
    loss_fn = jax.jit(triplet_loss, static_argnames=("max_tile_rows",))

    # Case 1: small (batch, features) matching the module's usage; single tile.
    k1, k2, k3 = jax.random.split(jax.random.fold_in(key, 0), 3)
    N, D = 8, 32
    anchor = jax.random.normal(k1, (N, D), dtype=jnp.float32)
    positive = jax.random.normal(k2, (N, D), dtype=jnp.float32)
    negative = jax.random.normal(k3, (N, D), dtype=jnp.float32)
    t1, t2, beta = 0.0, 0.0, 0.5

    loss = loss_fn(anchor, positive, negative, t1, t2, beta)
    jax.block_until_ready(loss)
    ref = _reference(anchor, positive, negative, t1, t2, beta)
    assert jnp.allclose(loss, ref, rtol=1e-5, atol=1e-5), (loss, ref)

    # Case 2: ragged batch + forced small tile -> exercises multi-step
    # accumulation, the boundary-tile masked path (no host padding), and the
    # scalar-prefetched hyper-parameters.
    k4, k5, k6 = jax.random.split(jax.random.fold_in(key, 1), 3)
    N2, D2 = 37, 160
    a2 = jax.random.normal(k4, (N2, D2), dtype=jnp.float32)
    p2 = jax.random.normal(k5, (N2, D2), dtype=jnp.float32)
    n2 = jax.random.normal(k6, (N2, D2), dtype=jnp.float32)

    loss2 = loss_fn(a2, p2, n2, 0.1, 0.05, 0.7, max_tile_rows=16)
    jax.block_until_ready(loss2)
    ref2 = _reference(a2, p2, n2, 0.1, 0.05, 0.7)
    assert jnp.allclose(loss2, ref2, rtol=1e-5, atol=1e-5), (loss2, ref2)

    print("KERNEL_OK")
</pallas_src>

<mosaic_0001>
module attributes {stable_mosaic.version = 11 : i64} {
  func.func @_triplet_kernel(%arg0: i32, %arg1: memref<3xf32, #tpu.memory_space<smem>>, %arg2: memref<8x32xf32, #tpu.memory_space<vmem>>, %arg3: memref<8x32xf32, #tpu.memory_space<vmem>>, %arg4: memref<8x32xf32, #tpu.memory_space<vmem>>, %arg5: memref<1x1xf32, #tpu.memory_space<vmem>>, %arg6: memref<1x1xf32, #tpu.memory_space<vmem>>) attributes {dimension_semantics = [#tpu.dimension_semantics<arbitrary>], iteration_bounds = array<i64: 1>, scalar_prefetch = 1 : i64, scratch_operands = 1 : i64, tpu.core_type = #tpu.core_type<tc>, window_params = [{transform_indices = @transform_0, window_bounds = array<i64: 8, 32>}, {transform_indices = @transform_1, window_bounds = array<i64: 8, 32>}, {transform_indices = @transform_2, window_bounds = array<i64: 8, 32>}, {pipeline_mode = #tpu.pipeline_mode<synchronous>, transform_indices = @transform_3, window_bounds = array<i64: 1, 1>}]} {
    %c0_i32 = arith.constant 0 : i32
    %0 = arith.cmpi eq, %arg0, %c0_i32 : i32
    %1 = arith.extui %0 : i1 to i32
    %c0_i32_0 = arith.constant 0 : i32
    %2 = arith.cmpi ne, %1, %c0_i32_0 : i32
    scf.if %2 {
      %cst_17 = arith.constant 0.000000e+00 : f32
      %37 = vector.broadcast %cst_17 : f32 to vector<1x1xf32>
      %c0_18 = arith.constant 0 : index
      %c0_19 = arith.constant 0 : index
      %38 = vector.load %arg6[%c0_18, %c0_19] : memref<1x1xf32, #tpu.memory_space<vmem>>, vector<1x1xf32>
      tpu.vector_store %arg6[%c0_18, %c0_19], %37 {strides = array<i32>} : memref<1x1xf32, #tpu.memory_space<vmem>>, vector<1x1xf32>,
    } else {
    }
    %c0 = arith.constant 0 : index
    %3 = memref.load %arg1[%c0] : memref<3xf32, #tpu.memory_space<smem>>
    %c1 = arith.constant 1 : index
    %4 = memref.load %arg1[%c1] : memref<3xf32, #tpu.memory_space<smem>>
    %c2 = arith.constant 2 : index
    %5 = memref.load %arg1[%c2] : memref<3xf32, #tpu.memory_space<smem>>
    %c0_1 = arith.constant 0 : index
    %c0_2 = arith.constant 0 : index
    %6 = vector.load %arg2[%c0_1, %c0_2] : memref<8x32xf32, #tpu.memory_space<vmem>>, vector<8x32xf32>
    %c0_3 = arith.constant 0 : index
    %c0_4 = arith.constant 0 : index
    %7 = vector.load %arg3[%c0_3, %c0_4] : memref<8x32xf32, #tpu.memory_space<vmem>>, vector<8x32xf32>
    %8 = arith.subf %6, %7 : vector<8x32xf32>
    %cst = arith.constant 9.99999997E-7 : f32
    %9 = vector.broadcast %cst : f32 to vector<8x32xf32>
    %10 = arith.addf %8, %9 : vector<8x32xf32>
    %c0_5 = arith.constant 0 : index
    %c0_6 = arith.constant 0 : index
    %11 = vector.load %arg4[%c0_5, %c0_6] : memref<8x32xf32, #tpu.memory_space<vmem>>, vector<8x32xf32>
    %12 = arith.subf %6, %11 : vector<8x32xf32>
    %cst_7 = arith.constant 9.99999997E-7 : f32
    %13 = vector.broadcast %cst_7 : f32 to vector<8x32xf32>
    %14 = arith.addf %12, %13 : vector<8x32xf32>
    %15 = arith.mulf %10, %10 : vector<8x32xf32>
    %cst_8 = arith.constant dense<0.000000e+00> : vector<8xf32>
    %16 = vector.multi_reduction <add>, %15, %cst_8 [1] : vector<8x32xf32> to vector<8xf32>
    %17 = vector.shape_cast %16 : vector<8xf32> to vector<8x1xf32>
    %18 = arith.mulf %14, %14 : vector<8x32xf32>
    %cst_9 = arith.constant dense<0.000000e+00> : vector<8xf32>
    %19 = vector.multi_reduction <add>, %18, %cst_9 [1] : vector<8x32xf32> to vector<8xf32>
    %20 = vector.shape_cast %19 : vector<8xf32> to vector<8x1xf32>
    %21 = arith.subf %17, %20 : vector<8x1xf32>
    %22 = vector.broadcast %3 : f32 to vector<8x1xf32>
    %23 = arith.maximumf %21, %22 : vector<8x1xf32>
    %24 = vector.broadcast %4 : f32 to vector<8x1xf32>
    %25 = arith.maximumf %17, %24 : vector<8x1xf32>
    %26 = vector.broadcast %5 : f32 to vector<8x1xf32>
    %27 = arith.mulf %26, %25 : vector<8x1xf32>
    %28 = arith.addf %23, %27 : vector<8x1xf32>
    %c0_10 = arith.constant 0 : index
    %c0_11 = arith.constant 0 : index
    %29 = vector.load %arg6[%c0_10, %c0_11] : memref<1x1xf32, #tpu.memory_space<vmem>>, vector<1x1xf32>
    %cst_12 = arith.constant dense<0.000000e+00> : vector<1xf32>
    %30 = vector.multi_reduction <add>, %28, %cst_12 [0] : vector<8x1xf32> to vector<1xf32>
    %31 = vector.shape_cast %30 : vector<1xf32> to vector<1x1xf32>
    %32 = arith.addf %29, %31 : vector<1x1xf32>
    %c0_13 = arith.constant 0 : index
    %c0_14 = arith.constant 0 : index
    %33 = vector.load %arg6[%c0_13, %c0_14] : memref<1x1xf32, #tpu.memory_space<vmem>>, vector<1x1xf32>
    tpu.vector_store %arg6[%c0_13, %c0_14], %32 {strides = array<i32>} : memref<1x1xf32, #tpu.memory_space<vmem>>, vector<1x1xf32>,
    %c0_i32_15 = arith.constant 0 : i32
    %34 = arith.cmpi eq, %arg0, %c0_i32_15 : i32
    %35 = arith.extui %34 : i1 to i32
    %c0_i32_16 = arith.constant 0 : i32
    %36 = arith.cmpi ne, %35, %c0_i32_16 : i32
    scf.if %36 {
      %c0_17 = arith.constant 0 : index
      %c0_18 = arith.constant 0 : index
      %37 = vector.load %arg6[%c0_17, %c0_18] : memref<1x1xf32, #tpu.memory_space<vmem>>, vector<1x1xf32>
      %c0_19 = arith.constant 0 : index
      %c0_20 = arith.constant 0 : index
      %38 = vector.load %arg5[%c0_19, %c0_20] : memref<1x1xf32, #tpu.memory_space<vmem>>, vector<1x1xf32>
      tpu.vector_store %arg5[%c0_19, %c0_20], %37 {strides = array<i32>} : memref<1x1xf32, #tpu.memory_space<vmem>>, vector<1x1xf32>,
    } else {
    }
    return
  }
  func.func @transform_0(%arg0: i32, %arg1: memref<3xf32, #tpu.memory_space<smem>>) -> (i32, i32) {
    %c0_i32 = arith.constant 0 : i32
    %c0_i32_0 = arith.constant 0 : i32
    return %arg0, %c0_i32 : i32, i32
  }
  func.func @transform_1(%arg0: i32, %arg1: memref<3xf32, #tpu.memory_space<smem>>) -> (i32, i32) {
    %c0_i32 = arith.constant 0 : i32
    %c0_i32_0 = arith.constant 0 : i32
    return %arg0, %c0_i32 : i32, i32
  }
  func.func @transform_2(%arg0: i32, %arg1: memref<3xf32, #tpu.memory_space<smem>>) -> (i32, i32) {
    %c0_i32 = arith.constant 0 : i32
    %c0_i32_0 = arith.constant 0 : i32
    return %arg0, %c0_i32 : i32, i32
  }
  func.func @transform_3(%arg0: i32, %arg1: memref<3xf32, #tpu.memory_space<smem>>) -> (i32, i32) {
    %c0_i32 = arith.constant 0 : i32
    %c0_i32_0 = arith.constant 0 : i32
    %c0_i32_1 = arith.constant 0 : i32
    return %c0_i32, %c0_i32_0 : i32, i32
  }
}

</mosaic_0001>

<llo_original>
// kernel: triplet_loss.1
$region0: #{triplet_loss.1}
  #allocation0 [shape = 'u32[]', space=smem, size = 0x4, offset = 0x4, fixed_abs, tag = 'smem constant byte address 0x4 - core index']
  #allocation1 [shape = 'u32[144,128]{1,0:T(1,128)}', space=vmem, size = 0x12000, scoped, tag = 'internal scratch']
  #allocation2 [shape = 'f32[1,1]{1,0:T(1,128)}', space=vmem, size = 0x200, scoped, tag = 'scratch operand']
  #allocation3 [shape = 's32[1]{0}', space=sflag, size = 0x4, scoped, tag = 'scoped memory for triplet_loss.1']
  #allocation4 [shape = 'u8[512]{0}', space=smem, size = 0x200, scoped, tag = 'prefetched SMEM operand 0']
  %s0 = inlined_call_operand.vmem [shape: f32[3], index: 0, kind: input, shape index: {}]
  %s1 = inlined_call_operand.vmem [shape: f32[8,32], index: 1, kind: input, shape index: {}]
  %s2 = inlined_call_operand.vmem [shape: f32[8,32], index: 2, kind: input, shape index: {}]
  %s3 = inlined_call_operand.hbm [shape: f32[8,32], index: 3, kind: input, shape index: {}]
  %s4 = inlined_call_operand.hbm [shape: f32[1,1], index: 4, kind: output, shape index: {}]
  %s5 = sld [smem:[#allocation0]]
  $region34: #{triplet_loss.1} parent=0
    _
  %s7 = ssub.s32 1, %s5
  %s8 = scalar_select 0, %s7, %s5
  %s9 = sshll.u32 %s0, 4
  %s10 = int_to_ptr.vmem [resolvable:$true] %s9
  %12 = dma.vmem_to_smem %s10, 16, [#allocation4], [#allocation3]
  %13 = dma.done [#allocation3], 16
  %14 = sfence
  $region1: #{triplet_loss.1} parent=0
    #allocation5 [shape = 'u8[4096]{0}', space=vmem, size = 0x1000, scoped, tag = 'input window, operand 3, single buffered']
    #allocation6 [shape = 's32[1]{0}', space=sflag, size = 0x4, scoped, tag = 'scoped memory for triplet_loss.1']
    #allocation7 [shape = 's32[1]{0}', space=sflag, size = 0x4, scoped, tag = 'scoped memory for triplet_loss.1']
    #allocation8 [shape = 'u8[512]{0}', space=vmem, size = 0x400, scoped, tag = 'output window, operand 0, single buffered']
    %15 = vsyncpa [#allocation6], 0
    %16 = vsyncpa [#allocation7], 0
    // Predicated region
    $region2: #{triplet_loss.1} parent=1 // pred_check
      _
    $region3: #{triplet_loss.1} parent=1 // pred_check_branch
      %18 = sbr.rel (0) target = $region5
    $region4: #{triplet_loss.1} parent=1 // pred_region
      _
    $region5: #{triplet_loss.1} parent=1 // pred_fallthru
      _
    // Predicated region
    $region6: #{triplet_loss.1} parent=1 // pred_check
      _
    $region7: #{triplet_loss.1} parent=1 // pred_check_branch
      %20 = sbr.rel (0) target = $region9
    $region8: #{triplet_loss.1} parent=1 // pred_region
      _
    $region9: #{triplet_loss.1} parent=1 // pred_fallthru
      _
    // Predicated region
    $region10: #{triplet_loss.1} parent=1 // pred_check
      _
    $region11: #{triplet_loss.1} parent=1 // pred_check_branch
      %22 = sbr.rel (0) target = $region13
    $region12: #{triplet_loss.1} parent=1 // pred_region
      %s24 = ssub.s32 128, 128
      %25 = vsyncadd [#allocation6], %s24
      %s27 = sshll.u32 [#allocation5], 4
      %s28 = int_to_ptr.vmem [resolvable:$true] %s27
      %30 = dma.hbm_to_vmem [thread:$0]  %s3, 128, %s28, [#allocation6]
    $region13: #{triplet_loss.1} parent=1 // pred_fallthru
      _
    // Predicated region
    $region14: #{triplet_loss.1} parent=1 // pred_check
      _
    $region15: #{triplet_loss.1} parent=1 // pred_check_branch
      %32 = sbr.rel (0) target = $region17
    $region16: #{triplet_loss.1} parent=1 // pred_region
      %33 = dma.done [#allocation6], 128
    $region17: #{triplet_loss.1} parent=1 // pred_fallthru
      _
    %p34 = scmp.eq.s32.totalorder 0, 0
    // Predicated region
    $region18: #{triplet_loss.1} parent=1 // pred_check
      %p35 = pneg %p34
    $region19: #{triplet_loss.1} parent=1 // pred_check_branch
      %37 = sbr.rel (%p35) target = $region21
    $region20: #{triplet_loss.1} parent=1 // pred_region
      %vm38 = vcmask 0
      %39 = vst.msk [vmem:[#allocation2] sm:$0x1] %vm38, 0.0
    $region21: #{triplet_loss.1} parent=1 // pred_fallthru
      _
    %s40 = sld [smem:[#allocation4]]
    %s41 = sld [smem:[#allocation4 + $0x1]]
    %s42 = sld [smem:[#allocation4 + $0x2]]
    %v43 = vld [vmem:[%s1] sm:$0xff]
    %v44 = vld [vmem:[%s2] sm:$0xff]
    %v45 = vsub.f32 %v43, %v44
    %v46 = vadd.f32 %v45, 1e-06
    %v47 = vld [vmem:[#allocation5] sm:$0xff]
    %v48 = vsub.f32 %v43, %v47
    %v49 = vadd.f32 %v48, 1e-06
    %v50 = vmul.f32 %v46, %v46
    %vm51 = vcmask 261120
    %v52 = vsel %vm51, %v50, 0.0
    %53 = vadd.xlane.f32.xlu0 %v52
    %v54 = vpop.xlane.xlu0 %53
    %v55 = vmul.f32 %v49, %v49
    %v56 = vsel %vm51, %v55, 0.0
    %57 = vadd.xlane.f32.xlu0 %v56
    %v58 = vpop.xlane.xlu0 %57
    %v59 = vsub.f32 %v54, %v58
    %v60 = vstv %s40
    %v61 = vmax.f32 %v59, %v60
    %v62 = vstv %s41
    %v63 = vmax.f32 %v54, %v62
    %v64 = vstv %s42
    %v65 = vmul.f32 %v64, %v63
    %v66 = vadd.f32 %v61, %v65
    %v67 = vld [vmem:[#allocation2] sm:$0x1]
    %v68 = vrot.slane %v66, 4
    %v69 = vadd.f32 %v66, %v68
    %v70 = vrot.slane %v69, 2
    %v71 = vadd.f32 %v69, %v70
    %v72 = vrot.slane %v71, 1
    %v73 = vadd.f32 %v71, %v72
    %v74 = vadd.f32 %v67, %v73
    %vm75 = vcmask 0
    %76 = vst.msk [vmem:[#allocation2] sm:$0x1] %vm75, %v74
    // Predicated region
    $region22: #{triplet_loss.1} parent=1 // pred_check
      %p77 = pneg %p34
    $region23: #{triplet_loss.1} parent=1 // pred_check_branch
      %79 = sbr.rel (%p77) target = $region25
    $region24: #{triplet_loss.1} parent=1 // pred_region
      %v80 = vld [vmem:[#allocation2] sm:$0x1]
      %81 = vst.msk [vmem:[#allocation8] sm:$0x1] %vm75, %v80
    $region25: #{triplet_loss.1} parent=1 // pred_fallthru
      _
    // Predicated region
    $region26: #{triplet_loss.1} parent=1 // pred_check
      _
    $region27: #{triplet_loss.1} parent=1 // pred_check_branch
      %83 = sbr.rel (0) target = $region29
    $region28: #{triplet_loss.1} parent=1 // pred_region
      %s85 = ssub.s32 16, 16
      %86 = vsyncadd [#allocation7], %s85
      %s88 = sshll.u32 [#allocation8], 4
      %s89 = int_to_ptr.vmem [resolvable:$true] %s88
      %91 = dma.vmem_to_hbm [thread:$0]  %s89, 16, %s4, [#allocation7]
    $region29: #{triplet_loss.1} parent=1 // pred_fallthru
      _
    // Predicated region
    $region30: #{triplet_loss.1} parent=1 // pred_check
      _
    $region31: #{triplet_loss.1} parent=1 // pred_check_branch
      %93 = sbr.rel (0) target = $region33
    $region32: #{triplet_loss.1} parent=1 // pred_region
      %94 = dma.done [#allocation7], 16
    $region33: #{triplet_loss.1} parent=1 // pred_fallthru
      _
    %95 = vsyncpa [#allocation6], 1
    %96 = vsyncpa [#allocation7], 1

</llo_original>
